<compile_context>
chip_gen: v7x
topology: tpu7x:2x2x1
jax: 0.10.0
libtpu: 0.0.40
codegen_flags: <defaults>
</compile_context>

<pallas_src>
import functools

import jax
import jax.numpy as jnp
from jax import lax
from jax.experimental import pallas as pl
from jax.experimental.pallas import tpu as pltpu


# ---------------------------------------------------------------------------
# Kernel A: fused ReLU -> 1x1 conv (no bias) -> per-tile BN partial statistics.
#   x_ref:     (1, C_in, TM)    input tile (channels on sublanes, M on lanes)
#   w_ref:     (C_out, C_in)    1x1 conv weight (resident)
#   y_ref:     (1, C_out, TM)   un-normalized conv output tile (lane-dense store)
#   stats_ref: (1, 1, C_out, 2) per-tile [sum, sum of squares] partials
# ---------------------------------------------------------------------------
def _conv1x1_stats_kernel(x_ref, w_ref, y_ref, stats_ref):
    x = jnp.maximum(x_ref[0], 0.0)                                  # ReLU once per element
    y = jnp.dot(w_ref[...], x, preferred_element_type=jnp.float32)  # (C_out, TM), single matmul
    y_ref[0] = y
    s = jnp.sum(y, axis=-1, keepdims=True)                          # (C_out, 1)
    sq = jnp.sum(y * y, axis=-1, keepdims=True)                     # (C_out, 1)
    stats_ref[0, 0] = jnp.concatenate([s, sq], axis=-1)             # (C_out, 2)


# ---------------------------------------------------------------------------
# Kernel B: per-plane affine (folded BN, identity when no preprocess) + 3x3 pool.
#   y_ref:     (TP, H, W)       planes (flattened N*C)
#   scale_ref: (TP, 1, 1)       per-plane BN scale
#   shift_ref: (TP, 1, 1)       per-plane BN shift
#   o_ref:     (TP, H, W)       dense (stride-1) pooled output
#   pad_ref:   (TP, H+2, W+2)   VMEM scratch holding the padded window
# ---------------------------------------------------------------------------
def _pool_kernel(y_ref, scale_ref, shift_ref, o_ref, pad_ref, *, mode):
    tp, h, w = y_ref.shape
    pad_val = -jnp.inf if mode == "max" else 0.0
    pad_ref[...] = jnp.full(pad_ref.shape, pad_val, jnp.float32)
    pad_ref[:, 1:h + 1, 1:w + 1] = y_ref[...] * scale_ref[...] + shift_ref[...]

    if mode == "max":
        acc = jnp.full((tp, h, w), -jnp.inf, jnp.float32)
        for i in range(3):
            for j in range(3):
                acc = jnp.maximum(acc, pad_ref[:, i:i + h, j:j + w])
        o_ref[...] = acc
    else:  # avg, count_include_pad=False
        acc = jnp.zeros((tp, h, w), jnp.float32)
        for i in range(3):
            for j in range(3):
                acc = acc + pad_ref[:, i:i + h, j:j + w]
        rows = lax.broadcasted_iota(jnp.int32, (h, w), 0)
        cols = lax.broadcasted_iota(jnp.int32, (h, w), 1)
        rv = 3 - (rows == 0).astype(jnp.int32) - (rows == h - 1).astype(jnp.int32)
        cv = 3 - (cols == 0).astype(jnp.int32) - (cols == w - 1).astype(jnp.int32)
        cnt = (rv * cv).astype(jnp.float32)           # number of valid (non-pad) window elems
        o_ref[...] = acc / cnt[None, :, :]


# ---------------------------------------------------------------------------
# Tile pickers (keep lane tiles multiples of 128 when the axis is split).
# ---------------------------------------------------------------------------
def _pick_lane_tile(total, cap=2048):
    if total <= cap:
        return total
    t = (cap // 128) * 128
    while t >= 128:
        if total % t == 0:
            return t
        t -= 128
    return total  # fall back: single full-extent tile


def _largest_divisor(total, cap):
    d = min(total, cap)
    while total % d:
        d -= 1
    return d


# ---------------------------------------------------------------------------
# POOLING forward.
# ---------------------------------------------------------------------------
def pooling_forward(x, mode, stride=1, weight=None, gamma=None, beta=None, eps=1e-5):
    """x: (N, C_in, H, W). weight: (C_out, C_in, 1, 1) or None (C_in == C_out case)."""
    n, c_in, h, w = x.shape
    x = x.astype(jnp.float32)

    if weight is not None:
        c_out = weight.shape[0]
        if gamma is None:
            gamma = jnp.ones((c_out,), jnp.float32)
        if beta is None:
            beta = jnp.zeros((c_out,), jnp.float32)
        hw = h * w
        m_total = n * hw
        tm = _pick_lane_tile(hw)
        x3 = x.reshape(n, c_in, hw)                     # free reshape: M on lanes
        w2 = weight.reshape(c_out, c_in).astype(jnp.float32)

        y3, partial = pl.pallas_call(
            _conv1x1_stats_kernel,
            grid=(n, hw // tm),
            in_specs=[
                pl.BlockSpec((1, c_in, tm), lambda i, j: (i, 0, j)),
                pl.BlockSpec((c_out, c_in), lambda i, j: (0, 0)),
            ],
            out_specs=[
                pl.BlockSpec((1, c_out, tm), lambda i, j: (i, 0, j)),
                pl.BlockSpec((1, 1, c_out, 2), lambda i, j: (i, j, 0, 0)),
            ],
            out_shape=[
                jax.ShapeDtypeStruct((n, c_out, hw), jnp.float32),
                jax.ShapeDtypeStruct((n, hw // tm, c_out, 2), jnp.float32),
            ],
            compiler_params=pltpu.CompilerParams(
                dimension_semantics=("parallel", "parallel")),
        )(x3, w2)

        # Tiny O(C_out) BN finalize: fold batch stats + affine into per-plane scale/shift.
        totals = jnp.sum(partial, axis=(0, 1))          # (C_out, 2)
        mean = totals[:, 0] / m_total
        var = totals[:, 1] / m_total - mean * mean      # biased batch variance (training mode)
        ch_scale = gamma.astype(jnp.float32) * lax.rsqrt(var + eps)
        ch_shift = beta.astype(jnp.float32) - mean * ch_scale

        planes = y3.reshape(n * c_out, h, w)            # free reshape: plane p = n*C_out + c
        scale_p = jnp.tile(ch_scale, n).reshape(n * c_out, 1, 1)
        shift_p = jnp.tile(ch_shift, n).reshape(n * c_out, 1, 1)
        c_eff = c_out
    else:
        planes = x.reshape(n * c_in, h, w)
        scale_p = jnp.ones((n * c_in, 1, 1), jnp.float32)
        shift_p = jnp.zeros((n * c_in, 1, 1), jnp.float32)
        c_eff = c_in

    p_total = planes.shape[0]
    tp = _largest_divisor(p_total, 64)

    pooled = pl.pallas_call(
        functools.partial(_pool_kernel, mode=mode),
        grid=(p_total // tp,),
        in_specs=[
            pl.BlockSpec((tp, h, w), lambda i: (i, 0, 0)),
            pl.BlockSpec((tp, 1, 1), lambda i: (i, 0, 0)),
            pl.BlockSpec((tp, 1, 1), lambda i: (i, 0, 0)),
        ],
        out_specs=pl.BlockSpec((tp, h, w), lambda i: (i, 0, 0)),
        out_shape=jax.ShapeDtypeStruct((p_total, h, w), jnp.float32),
        scratch_shapes=[pltpu.VMEM((tp, h + 2, w + 2), jnp.float32)],
        compiler_params=pltpu.CompilerParams(dimension_semantics=("parallel",)),
    )(planes, scale_p, shift_p)

    # stride > 1 handled as a strided subsample of the dense stride-1 result (glue; no-op at stride=1)
    pooled = pooled[:, ::stride, ::stride]
    ho = (h - 1) // stride + 1
    wo = (w - 1) // stride + 1
    return pooled.reshape(n, c_eff, ho, wo)


# ---------------------------------------------------------------------------
# Pure-JAX reference (PyTorch semantics).
# ---------------------------------------------------------------------------
def _reference(x, mode, stride, weight=None, gamma=None, beta=None, eps=1e-5):
    if weight is not None:
        xr = jnp.maximum(x, 0.0)
        conv = lax.conv_general_dilated(
            xr, weight, window_strides=(1, 1), padding=((0, 0), (0, 0)),
            dimension_numbers=("NCHW", "OIHW", "NCHW"),
            precision=lax.Precision.HIGHEST)
        mean = jnp.mean(conv, axis=(0, 2, 3), keepdims=True)
        var = jnp.mean((conv - mean) ** 2, axis=(0, 2, 3), keepdims=True)
        y = (conv - mean) * lax.rsqrt(var + eps)
        y = y * gamma.reshape(1, -1, 1, 1) + beta.reshape(1, -1, 1, 1)
    else:
        y = x
    pad = ((0, 0), (0, 0), (1, 1), (1, 1))
    if mode == "max":
        return lax.reduce_window(y, -jnp.inf, lax.max, (1, 1, 3, 3),
                                 (1, 1, stride, stride), pad)
    s = lax.reduce_window(y, 0.0, lax.add, (1, 1, 3, 3), (1, 1, stride, stride), pad)
    cnt = lax.reduce_window(jnp.ones_like(y), 0.0, lax.add, (1, 1, 3, 3),
                            (1, 1, stride, stride), pad)
    return s / cnt  # count_include_pad=False


if __name__ == "__main__":
    key = jax.random.PRNGKey(0)
    k1, k2, k3 = jax.random.split(key, 3)

    N, C_IN, C_OUT, H, W = 2, 4, 8, 16, 16
    x = jax.random.normal(k1, (N, C_IN, H, W), jnp.float32)
    weight = jax.random.normal(k2, (C_OUT, C_IN, 1, 1), jnp.float32) * 0.1
    gamma = jnp.ones((C_OUT,), jnp.float32)   # BatchNorm2d(affine=True) default init
    beta = jnp.zeros((C_OUT,), jnp.float32)
    # TODO(synk): BatchNorm2d running-stats buffer update (momentum) is a training
    # side-effect and is not emulated; forward output uses batch stats as in train mode.

    # Case 1: POOLING(C_in=4, C_out=8, stride=1, mode='avg') -> ReLUConvBN(1x1) + AvgPool2d
    out_avg = pooling_forward(x, "avg", stride=1, weight=weight, gamma=gamma, beta=beta)
    out_avg = jax.block_until_ready(out_avg)
    ref_avg = _reference(x, "avg", 1, weight, gamma, beta)
    assert out_avg.shape == (N, C_OUT, H, W), out_avg.shape
    assert jnp.allclose(out_avg, ref_avg, atol=2e-3, rtol=2e-3), \
        float(jnp.max(jnp.abs(out_avg - ref_avg)))

    # Case 2: POOLING(C_in=4, C_out=4, stride=1, mode='max') -> no preprocess, MaxPool2d only
    x2 = jax.random.normal(k3, (N, C_IN, H, W), jnp.float32)
    out_max = pooling_forward(x2, "max", stride=1)
    out_max = jax.block_until_ready(out_max)
    ref_max = _reference(x2, "max", 1)
    assert out_max.shape == (N, C_IN, H, W), out_max.shape
    assert jnp.allclose(out_max, ref_max, atol=1e-4, rtol=1e-4), \
        float(jnp.max(jnp.abs(out_max - ref_max)))

    # Case 3: stride=2 avg pool (no preprocess) to exercise the strided path
    out_s2 = pooling_forward(x2, "avg", stride=2)
    out_s2 = jax.block_until_ready(out_s2)
    ref_s2 = _reference(x2, "avg", 2)
    assert out_s2.shape == (N, C_IN, 8, 8), out_s2.shape
    assert jnp.allclose(out_s2, ref_s2, atol=1e-4, rtol=1e-4), \
        float(jnp.max(jnp.abs(out_s2 - ref_s2)))

    print("KERNEL_OK")
</pallas_src>

<mosaic_0001>
module attributes {stable_mosaic.version = 11 : i64} {
  func.func @_conv1x1_stats_kernel(%arg0: i32, %arg1: i32, %arg2: memref<1x4x256xf32, #tpu.memory_space<vmem>>, %arg3: memref<8x4xf32, #tpu.memory_space<vmem>>, %arg4: memref<1x8x256xf32, #tpu.memory_space<vmem>>, %arg5: memref<1x1x8x2xf32, #tpu.memory_space<vmem>>) attributes {dimension_semantics = [#tpu.dimension_semantics<parallel>, #tpu.dimension_semantics<parallel>], iteration_bounds = array<i64: 2, 1>, scalar_prefetch = 0 : i64, scratch_operands = 0 : i64, tpu.core_type = #tpu.core_type<tc>, window_params = [{transform_indices = @transform_0, window_bounds = array<i64: 1, 4, 256>}, {pipeline_mode = #tpu.pipeline_mode<synchronous>, transform_indices = @transform_1, window_bounds = array<i64: 8, 4>}, {transform_indices = @transform_2, window_bounds = array<i64: 1, 8, 256>}, {transform_indices = @transform_3, window_bounds = array<i64: 1, 1, 8, 2>}]} {
    %c0 = arith.constant 0 : index
    %c0_0 = arith.constant 0 : index
    %c0_1 = arith.constant 0 : index
    %0 = vector.load %arg2[%c0, %c0_0, %c0_1] : memref<1x4x256xf32, #tpu.memory_space<vmem>>, vector<1x4x256xf32>
    %1 = vector.shape_cast %0 : vector<1x4x256xf32> to vector<4x256xf32>
    %cst = arith.constant 0.000000e+00 : f32
    %2 = vector.broadcast %cst : f32 to vector<4x256xf32>
    %3 = arith.maximumf %1, %2 : vector<4x256xf32>
    %c0_2 = arith.constant 0 : index
    %c0_3 = arith.constant 0 : index
    %4 = vector.load %arg3[%c0_2, %c0_3] : memref<8x4xf32, #tpu.memory_space<vmem>>, vector<8x4xf32>
    %cst_4 = arith.constant dense<0.000000e+00> : vector<8x256xf32>
    %5 = tpu.matmul %4, %3, %cst_4 {dimension_numbers = #tpu.dot_dimension_numbers<[1], [0], [0], [1], [0, 0, 1, 1], [], []>} : vector<8x4xf32>, vector<4x256xf32>, vector<8x256xf32> -> vector<8x256xf32>
    %c0_5 = arith.constant 0 : index
    %c0_6 = arith.constant 0 : index
    %c0_7 = arith.constant 0 : index
    %6 = vector.load %arg4[%c0_5, %c0_6, %c0_7] : memref<1x8x256xf32, #tpu.memory_space<vmem>>, vector<1x8x256xf32>
    %7 = vector.shape_cast %6 : vector<1x8x256xf32> to vector<8x256xf32>
    %8 = vector.shape_cast %5 : vector<8x256xf32> to vector<1x8x256xf32>
    tpu.vector_store %arg4[%c0_5, %c0_6, %c0_7], %8 {strides = array<i32>} : memref<1x8x256xf32, #tpu.memory_space<vmem>>, vector<1x8x256xf32>,
    %cst_8 = arith.constant dense<0.000000e+00> : vector<8xf32>
    %9 = vector.multi_reduction <add>, %5, %cst_8 [1] : vector<8x256xf32> to vector<8xf32>
    %10 = vector.shape_cast %9 : vector<8xf32> to vector<8x1xf32>
    %11 = arith.mulf %5, %5 : vector<8x256xf32>
    %cst_9 = arith.constant dense<0.000000e+00> : vector<8xf32>
    %12 = vector.multi_reduction <add>, %11, %cst_9 [1] : vector<8x256xf32> to vector<8xf32>
    %13 = vector.shape_cast %12 : vector<8xf32> to vector<8x1xf32>
    %14 = tpu.concatenate %10, %13 in 1 : vector<8x1xf32>, vector<8x1xf32> -> vector<8x2xf32>
    %c0_10 = arith.constant 0 : index
    %c0_11 = arith.constant 0 : index
    %c0_12 = arith.constant 0 : index
    %c0_13 = arith.constant 0 : index
    %15 = vector.load %arg5[%c0_10, %c0_11, %c0_12, %c0_13] : memref<1x1x8x2xf32, #tpu.memory_space<vmem>>, vector<1x1x8x2xf32>
    %16 = vector.shape_cast %15 : vector<1x1x8x2xf32> to vector<8x2xf32>
    %17 = vector.shape_cast %14 : vector<8x2xf32> to vector<1x1x8x2xf32>
    tpu.vector_store %arg5[%c0_10, %c0_11, %c0_12, %c0_13], %17 {strides = array<i32>} : memref<1x1x8x2xf32, #tpu.memory_space<vmem>>, vector<1x1x8x2xf32>,
    return
  }
  func.func @transform_0(%arg0: i32, %arg1: i32) -> (i32, i32, i32) {
    %c0_i32 = arith.constant 0 : i32
    %c0_i32_0 = arith.constant 0 : i32
    return %arg0, %c0_i32, %arg1 : i32, i32, i32
  }
  func.func @transform_1(%arg0: i32, %arg1: i32) -> (i32, i32) {
    %c0_i32 = arith.constant 0 : i32
    %c0_i32_0 = arith.constant 0 : i32
    %c0_i32_1 = arith.constant 0 : i32
    return %c0_i32, %c0_i32_0 : i32, i32
  }
  func.func @transform_2(%arg0: i32, %arg1: i32) -> (i32, i32, i32) {
    %c0_i32 = arith.constant 0 : i32
    %c0_i32_0 = arith.constant 0 : i32
    return %arg0, %c0_i32, %arg1 : i32, i32, i32
  }
  func.func @transform_3(%arg0: i32, %arg1: i32) -> (i32, i32, i32, i32) {
    %c0_i32 = arith.constant 0 : i32
    %c0_i32_0 = arith.constant 0 : i32
    %c0_i32_1 = arith.constant 0 : i32
    return %arg0, %arg1, %c0_i32, %c0_i32_0 : i32, i32, i32, i32
  }
}

</mosaic_0001>

<llo_original>
// kernel: tpu_custom_call.1
$region0: #{tpu_custom_call.1}
  #allocation0 [shape = 'u32[]', space=smem, size = 0x4, offset = 0x4, fixed_abs, tag = 'smem constant byte address 0x4 - core index']
  #allocation1 [shape = 'u32[144,128]{1,0:T(1,128)}', space=vmem, size = 0x12000, scoped, tag = 'internal scratch']
  %s0 = inlined_call_operand.hbm [shape: f32[2,4,256], index: 0, kind: input, shape index: {}]
  %s1 = inlined_call_operand.vmem [shape: f32[8,4], index: 1, kind: input, shape index: {}]
  %s2 = inlined_call_operand.hbm [shape: f32[2,8,256], index: 2, kind: output, shape index: {0}]
  %s3 = inlined_call_operand.vmem [shape: f32[2,1,8,2], index: 3, kind: output, shape index: {1}]
  %4 = xla_tuple %s2, %s3
  %s5 = sld [smem:[#allocation0]]
  $region53: #{tpu_custom_call.1} parent=0
    _
  %s7 = ssub.s32 1, %s5
  %s8 = scalar_select 0, %s7, %s5
  $region1: #{tpu_custom_call.1} parent=0
    #allocation2 [shape = 'u8[8192]{0}', space=vmem, size = 0x2000, scoped, tag = 'input window, operand 0']
    #allocation3 [shape = 's32[2]{0}', space=sflag, size = 0x8, scoped, tag = 'scoped memory for tpu_custom_call.1']
    #allocation4 [shape = 's32[2]{0}', space=sflag, size = 0x8, scoped, tag = 'scoped memory for tpu_custom_call.1']
    #allocation5 [shape = 'u8[16384]{0}', space=vmem, size = 0x4000, scoped, tag = 'output window, operand 0']
    %9 = vsyncpa [#allocation3], 0
    %s10 = scalar_lea.sflag [#allocation3], 1
    %11 = vsyncpa %s10, 0
    %12 = vsyncpa [#allocation4], 0
    %s13 = scalar_lea.sflag [#allocation4], 1
    %14 = vsyncpa %s13, 0
    loop: start=0, step=1, limit=4
    $region2: #{tpu_custom_call.1} parent=1 // loop_pre_header
      _
    $region3: #{tpu_custom_call.1} parent=1 // loop_header
      %s16 = sphi 0, %s20
      %p17 = scmp.ge.s32.totalorder %s16, 4
      %s23 = sphi 0, %s35
      %s24 = sphi 0, %s31
      %s25 = sphi 0, %s23
      %s26 = sphi 0, %s24
      %s27 = sphi 0, %s25
      %s28 = sphi 0, %s26
      %s40 = sphi 0, %s42
      %s43 = sphi 0, %s40
      %s44 = sphi 0, %s43
      %s60 = sphi 0, %s44
      %s64 = sphi 0, %s64
      %s66 = sphi 0, %s64
      %s67 = sphi 0, %s66
      %s81 = sphi 0, %s67
      %s89 = sphi 0, %s91
      %s92 = sphi 0, %s89
      %s93 = sphi 0, %s92
      %s109 = sphi 0, %s93
      %s117 = sphi 0, %s119
      %s120 = sphi 0, %s117
      %s121 = sphi 0, %s120
      %s137 = sphi 0, %s121
    $region4: #{tpu_custom_call.1} parent=1 // loop_header_branch
      %19 = sbr.rel (%p17) target = $region8
    $region5: #{tpu_custom_call.1} parent=1 // loop_body
      %s21 = ssub.s32 %s16, 1
      %s22 = ssub.s32 %s16, 2
      %s29 = sadd.s32 1, %s24
      %p30 = scmp.ge.s32.totalorder %s29, 1
      %s31 = scalar_select %p30, 0, %s29
      %s32 = sadd.s32 1, %s23
      %s33 = scalar_select %p30, %s32, %s23
      %p34 = scmp.ge.s32.totalorder %s33, 2
      %s35 = scalar_select %p34, 0, %s33
      %s36 = ssub.s32 %s23, %s35
      %s37 = ssub.s32 %s24, %s31
      %s38 = sor.u32 %s36, %s37
      %p39 = scmp.eq.s32.totalorder %s38, 0
      %s41 = sadd.s32 %s40, 1
      %s42 = scalar_select %p39, %s40, %s41
      %p45 = pneg %p39
      %p46 = scmp.eq.s32.totalorder %s16, 1
      %p47 = por %p45, %p46
      %p48 = scmp.ne.s32.totalorder %s40, %s43
      %p49 = scmp.eq.s32.totalorder %s16, 0
      %p50 = por %p48, %p49
      %p51 = scmp.ne.s32.totalorder %s40, %s43
      %p52 = scmp.eq.s32.totalorder %s21, 1
      %p53 = por %p51, %p52
      %p54 = scmp.ne.s32.totalorder %s43, %s44
      %p55 = scmp.eq.s32.totalorder %s21, 0
      %p56 = por %p54, %p55
      %p57 = scmp.ne.s32.totalorder %s43, %s44
      %p58 = scmp.eq.s32.totalorder %s22, 1
      %p59 = por %p57, %p58
      %p61 = scmp.ne.s32.totalorder %s44, %s60
      %p62 = scmp.eq.s32.totalorder %s22, 0
      %p63 = por %p61, %p62
      %s65 = sadd.s32 %s64, 1
      %p68 = scmp.eq.s32.totalorder %s16, 1
      %p69 = scmp.ne.s32.totalorder %s64, %s66
      %p70 = scmp.eq.s32.totalorder %s16, 0
      %p71 = por %p69, %p70
      %p72 = scmp.ne.s32.totalorder %s64, %s66
      %p73 = scmp.eq.s32.totalorder %s21, 1
      %p74 = por %p72, %p73
      %p75 = scmp.ne.s32.totalorder %s66, %s67
      %p76 = scmp.eq.s32.totalorder %s21, 0
      %p77 = por %p75, %p76
      %p78 = scmp.ne.s32.totalorder %s66, %s67
      %p79 = scmp.eq.s32.totalorder %s22, 1
      %p80 = por %p78, %p79
      %p82 = scmp.ne.s32.totalorder %s67, %s81
      %p83 = scmp.eq.s32.totalorder %s22, 0
      %p84 = por %p82, %p83
      %s85 = ssub.s32 %s23, %s35
      %s86 = ssub.s32 %s24, %s31
      %s87 = sor.u32 %s85, %s86
      %p88 = scmp.eq.s32.totalorder %s87, 0
      %s90 = sadd.s32 %s89, 1
      %s91 = scalar_select %p88, %s89, %s90
      %p94 = pneg %p88
      %p95 = scmp.eq.s32.totalorder %s16, 1
      %p96 = por %p94, %p95
      %p97 = scmp.ne.s32.totalorder %s89, %s92
      %p98 = scmp.eq.s32.totalorder %s16, 0
      %p99 = por %p97, %p98
      %p100 = scmp.ne.s32.totalorder %s89, %s92
      %p101 = scmp.eq.s32.totalorder %s21, 1
      %p102 = por %p100, %p101
      %p103 = scmp.ne.s32.totalorder %s92, %s93
      %p104 = scmp.eq.s32.totalorder %s21, 0
      %p105 = por %p103, %p104
      %p106 = scmp.ne.s32.totalorder %s92, %s93
      %p107 = scmp.eq.s32.totalorder %s22, 1
      %p108 = por %p106, %p107
      %p110 = scmp.ne.s32.totalorder %s93, %s109
      %p111 = scmp.eq.s32.totalorder %s22, 0
      %p112 = por %p110, %p111
      %s113 = ssub.s32 %s23, %s35
      %s114 = ssub.s32 %s24, %s31
      %s115 = sor.u32 %s113, %s114
      %p116 = scmp.eq.s32.totalorder %s115, 0
      %s118 = sadd.s32 %s117, 1
      %s119 = scalar_select %p116, %s117, %s118
      %p122 = pneg %p116
      %p123 = scmp.eq.s32.totalorder %s16, 1
      %p124 = por %p122, %p123
      %p125 = scmp.ne.s32.totalorder %s117, %s120
      %p126 = scmp.eq.s32.totalorder %s16, 0
      %p127 = por %p125, %p126
      %p128 = scmp.ne.s32.totalorder %s117, %s120
      %p129 = scmp.eq.s32.totalorder %s21, 1
      %p130 = por %p128, %p129
      %p131 = scmp.ne.s32.totalorder %s120, %s121
      %p132 = scmp.eq.s32.totalorder %s21, 0
      %p133 = por %p131, %p132
      %p134 = scmp.ne.s32.totalorder %s120, %s121
      %p135 = scmp.eq.s32.totalorder %s22, 1
      %p136 = por %p134, %p135
      %p138 = scmp.ne.s32.totalorder %s121, %s137
      %p139 = scmp.eq.s32.totalorder %s22, 0
      %p140 = por %p138, %p139
      %p141 = scmp.le.s32.totalorder 1, %s16
      %p142 = scmp.lt.s32.totalorder %s16, 3
      %p143 = pnand %p141, %p142
      %p144 = pneg %p143
      // Predicated region
      $region9: #{tpu_custom_call.1} parent=5 // pred_check
        _
      $region10: #{tpu_custom_call.1} parent=5 // pred_check_branch
        %146 = sbr.rel (%p143) target = $region12
      $region11: #{tpu_custom_call.1} parent=5 // pred_region
        %s147 = ssub.s32 %s16, 1
        // Predicated region
        $region13: #{tpu_custom_call.1} parent=11 // pred_check
          %p148 = pneg %p77
        $region14: #{tpu_custom_call.1} parent=11 // pred_check_branch
          %150 = sbr.rel (%p148) target = $region16
        $region15: #{tpu_custom_call.1} parent=11 // pred_region
          _
        $region16: #{tpu_custom_call.1} parent=11 // pred_fallthru
          _
      $region12: #{tpu_custom_call.1} parent=5 // pred_fallthru
        _
      %p151 = scmp.lt.s32.totalorder %s16, 2
      // Predicated region
      $region17: #{tpu_custom_call.1} parent=5 // pred_check
        %p152 = pneg %p151
      $region18: #{tpu_custom_call.1} parent=5 // pred_check_branch
        %154 = sbr.rel (%p152) target = $region20
      $region19: #{tpu_custom_call.1} parent=5 // pred_region
        // Predicated region
        $region21: #{tpu_custom_call.1} parent=19 // pred_check
          %p155 = pneg %p50
        $region22: #{tpu_custom_call.1} parent=19 // pred_check_branch
          %157 = sbr.rel (%p155) target = $region24
        $region23: #{tpu_custom_call.1} parent=19 // pred_region
          %s158 = sand.u32 %s40, 1
          %s159 = scalar_lea.sflag [#allocation3], %s158
          %s160 = sand.u32 %s40, 1
          %s161 = smul.addr %s160, 8
          %s162 = scalar_lea.vmem [#allocation2], %s161
          %s163 = smul.u32 2, %s24
          %s165 = ssub.s32 128, 128
          %166 = vsyncadd %s159, %s165
          %s167 = smul.addr %s23, 2
          %s168 = sadd.s32 %s163, %s167
          %s169 = smul.addr %s168, 64
          %s170 = scalar_lea.hbm %s0, %s169
          %s172 = sshll.u32 %s162, 4
          %s173 = int_to_ptr.vmem [resolvable:$true] %s172
          %175 = dma.hbm_to_vmem [thread:$0]  %s170, 128, %s173, %s159
        $region24: #{tpu_custom_call.1} parent=19 // pred_fallthru
          _
      $region20: #{tpu_custom_call.1} parent=5 // pred_fallthru
        _
      %p176 = scmp.le.s32.totalorder 1, %s16
      %p177 = scmp.lt.s32.totalorder %s16, 3
      %p178 = pnand %p176, %p177
      %p179 = pneg %p178
      // Predicated region
      $region25: #{tpu_custom_call.1} parent=5 // pred_check
        _
      $region26: #{tpu_custom_call.1} parent=5 // pred_check_branch
        %181 = sbr.rel (%p178) target = $region28
      $region27: #{tpu_custom_call.1} parent=5 // pred_region
        %s182 = ssub.s32 %s16, 1
        %s183 = sand.u32 %s43, 1
        %s184 = scalar_lea.sflag [#allocation3], %s183
        %s185 = sand.u32 %s43, 1
        %s186 = smul.addr %s185, 8
        %s187 = scalar_lea.vmem [#allocation2], %s186
        // Predicated region
        $region29: #{tpu_custom_call.1} parent=27 // pred_check
          %p188 = pneg %p56
        $region30: #{tpu_custom_call.1} parent=27 // pred_check_branch
          %190 = sbr.rel (%p188) target = $region32
        $region31: #{tpu_custom_call.1} parent=27 // pred_region
          %191 = dma.done %s184, 128
        $region32: #{tpu_custom_call.1} parent=27 // pred_fallthru
          _
        %s192 = sand.u32 %s43, 1
        %s193 = scalar_lea.sflag [#allocation3], %s192
        %s194 = sand.u32 %s43, 1
        %s195 = smul.addr %s194, 8
        %s196 = scalar_lea.vmem [#allocation2], %s195
        %p197 = pneg %p56
        %p198 = pneg %p53
        %p199 = pneg %p77
        %p200 = pneg %p74
        %p201 = pneg %p105
        %p202 = pneg %p102
        %s203 = sand.u32 %s92, 1
        %s204 = scalar_lea.sflag [#allocation4], %s203
        %s205 = sand.u32 %s92, 1
        %s206 = smul.addr %s205, 16
        %s207 = scalar_lea.vmem [#allocation5], %s206
        %p208 = pneg %p133
        %p209 = pneg %p130
        %p210 = scmp.lt.s32.totalorder %s25, 1
        %s211 = scalar_select %p210, %s25, 1
        %p212 = scmp.lt.s32.totalorder %s26, 0
        %s213 = scalar_select %p212, %s26, 0
        %s214 = sadd.s32 %s213, %s211
        %s215 = smul.addr %s214, 8
        %s216 = scalar_lea.vmem %s3, %s215
        %s217 = smul.u32 2, %s26
        %s218 = smul.u32 2, %s26
        %p219 = scmp.lt.s32.totalorder %s25, 1
        %s220 = scalar_select %p219, %s25, 1
        %p221 = scmp.lt.s32.totalorder %s26, 0
        %s222 = scalar_select %p221, %s26, 0
        %s223 = sadd.s32 %s222, %s220
        %s224 = smul.addr %s223, 8
        %s225 = scalar_lea.vmem %s3, %s224
        %v226 = vld [vmem:[%s187] sm:$0xff]
        %v227 = vmax.f32 %v226, 0.0
        %v228 = vld [vmem:[%s1] sm:$0xff]
        %v230 = vcombine.high %v227, %v227
        %vm231 = vcmask 31744
        %v233 = vsel %vm231, %v228, 0
        %vm235 = vcmask 1043456
        %v236 = vsel %vm235, %v227, 0
        %v238 = vsel %vm235, %v230, 0
        %240 = vmatprep.subr.mxu0 %v238
        %241 = vmatpush1.msra.mxu0 %v236
        %242 = vmatprep.subr.mxu0 0.0
        %243 = vmatpush1.msra.mxu0 0.0
        %244 = vmatprep.subr.mxu0 0.0
        %245 = vmatpush1.msra.mxu0 0.0
        %246 = vmatprep.subr.mxu0 0.0
        %247 = vmatpush1.msra.mxu0 0.0
        %248 = vmatprep.subr.mxu0 0.0
        %249 = vmatpush1.msra.mxu0 0.0
        %250 = vmatprep.subr.mxu0 0.0
        %251 = vmatpush1.msra.mxu0 0.0
        %252 = vmatprep.subr.mxu0 0.0
        %253 = vmatpush1.msra.mxu0 0.0
        %254 = vmatprep.subr.mxu0 0.0
        %255 = vmatpush1.msra.mxu0 0.0
        %256 = vmatprep.subr.mxu0 0.0
        %257 = vmatpush1.msra.mxu0 0.0
        %258 = vmatprep.subr.mxu0 0.0
        %259 = vmatpush1.msra.mxu0 0.0
        %260 = vmatprep.subr.mxu0 0.0
        %261 = vmatpush1.msra.mxu0 0.0
        %262 = vmatprep.subr.mxu0 0.0
        %263 = vmatpush1.msra.mxu0 0.0
        %264 = vmatprep.subr.mxu0 0.0
        %265 = vmatpush1.msra.mxu0 0.0
        %266 = vmatprep.subr.mxu0 0.0
        %267 = vmatpush1.msra.mxu0 0.0
        %268 = vmatprep.subr.mxu0 0.0
        %269 = vmatpush1.msra.mxu0 0.0
        %270 = vmatprep.subr.mxu0 0.0
        %271 = vmatpush1.msra.mxu0 0.0
        %272 = vmatprep.subr.mxu0 0.0
        %273 = vmatpush1.msra.mxu0 0.0
        %274 = vmatprep.subr.mxu0 0.0
        %275 = vmatpush1.msra.mxu0 0.0
        %276 = vmatprep.subr.mxu0 0.0
        %277 = vmatpush1.msra.mxu0 0.0
        %278 = vmatprep.subr.mxu0 0.0
        %279 = vmatpush1.msra.mxu0 0.0
        %280 = vmatprep.subr.mxu0 0.0
        %281 = vmatpush1.msra.mxu0 0.0
        %282 = vmatprep.subr.mxu0 0.0
        %283 = vmatpush1.msra.mxu0 0.0
        %284 = vmatprep.subr.mxu0 0.0
        %285 = vmatpush1.msra.mxu0 0.0
        %286 = vmatprep.subr.mxu0 0.0
        %287 = vmatpush1.msra.mxu0 0.0
        %288 = vmatprep.subr.mxu0 0.0
        %289 = vmatpush1.msra.mxu0 0.0
        %290 = vmatprep.subr.mxu0 0.0
        %291 = vmatpush1.msra.mxu0 0.0
        %292 = vmatprep.subr.mxu0 0.0
        %293 = vmatpush1.msra.mxu0 0.0
        %294 = vmatprep.subr.mxu0 0.0
        %295 = vmatpush1.msra.mxu0 0.0
        %296 = vmatprep.subr.mxu0 0.0
        %297 = vmatpush1.msra.mxu0 0.0
        %298 = vmatprep.subr.mxu0 0.0
        %299 = vmatpush1.msra.mxu0 0.0
        %300 = vmatprep.subr.mxu0 0.0
        %301 = vmatpush1.msra.mxu0 0.0
        %302 = vmatprep.subr.mxu0 0.0
        %303 = vmatpush1.msra.mxu0 0.0
        %304 = vmatprep.mubr.f32.mxu0 0.0
        %305 = vmatmul.mubr.f32.gmra.mrb[0].mxu0 %v233
        %v306 = vpop.f32.mrb[0].mxu0
        %v307 = vadd.f32 0.0, %v306
        %v308 = vpop.f32.mrb[0].mxu0
        %v309 = vadd.f32 0.0, %v308
        %310 = vdwg.mxu0
        %311 = vst [vmem:[%s207] sm:$0xff] %v307
        %312 = vst [vmem:[%s207 + $0x8] sm:$0xff] %v309
        %v313 = vadd.f32 %v307, %v309
        %314 = vadd.xlane.f32.xlu0 %v313
        %v315 = vpop.xlane.xlu0 %314
        %v316 = vmul.f32 %v307, %v307
        %v317 = vmul.f32 %v309, %v309
        %v318 = vadd.f32 %v316, %v317
        %319 = vadd.xlane.f32.xlu0 %v318
        %v320 = vpop.xlane.xlu0 %319
        %vm321 = vcmask 7168
        %v322 = vsel %vm321, %v315, %v320
        %vm323 = vcmask 15360
        %324 = vst.msk [vmem:[%s225] sm:$0xff] %vm323, %v322
        %s325 = sand.u32 %s92, 1
        %s326 = scalar_lea.sflag [#allocation4], %s325
        %s327 = sand.u32 %s92, 1
        %s328 = smul.addr %s327, 16
        %s329 = scalar_lea.vmem [#allocation5], %s328
        %p330 = scmp.lt.s32.totalorder %s25, 1
        %s331 = scalar_select %p330, %s25, 1
        %p332 = scmp.lt.s32.totalorder %s26, 0
        %s333 = scalar_select %p332, %s26, 0
        %s334 = sadd.s32 %s333, %s331
        %s335 = smul.addr %s334, 8
        %s336 = scalar_lea.vmem %s3, %s335
        // Predicated region
        $region33: #{tpu_custom_call.1} parent=27 // pred_check
          %p337 = pneg %p102
        $region34: #{tpu_custom_call.1} parent=27 // pred_check_branch
          %339 = sbr.rel (%p337) target = $region36
        $region35: #{tpu_custom_call.1} parent=27 // pred_region
          %s340 = smul.u32 2, %s26
          %s342 = ssub.s32 256, 256
          %343 = vsyncadd %s326, %s342
          %s344 = smul.addr %s25, 2
          %s345 = sadd.s32 %s340, %s344
          %s346 = smul.addr %s345, 128
          %s347 = scalar_lea.hbm %s2, %s346
          %s349 = sshll.u32 %s329, 4
          %s350 = int_to_ptr.vmem [resolvable:$true] %s349
          %352 = dma.vmem_to_hbm [thread:$0]  %s350, 256, %s347, %s326
        $region36: #{tpu_custom_call.1} parent=27 // pred_fallthru
          _
        // Predicated region
        $region37: #{tpu_custom_call.1} parent=27 // pred_check
          %p353 = pneg %p130
        $region38: #{tpu_custom_call.1} parent=27 // pred_check_branch
          %355 = sbr.rel (%p353) target = $region40
        $region39: #{tpu_custom_call.1} parent=27 // pred_region
          _
        $region40: #{tpu_custom_call.1} parent=27 // pred_fallthru
          _
      $region28: #{tpu_custom_call.1} parent=5 // pred_fallthru
        _
      %p356 = scmp.le.s32.totalorder 2, %s16
      // Predicated region
      $region41: #{tpu_custom_call.1} parent=5 // pred_check
        %p357 = pneg %p356
      $region42: #{tpu_custom_call.1} parent=5 // pred_check_branch
        %359 = sbr.rel (%p357) target = $region44
      $region43: #{tpu_custom_call.1} parent=5 // pred_region
        %s360 = ssub.s32 %s16, 2
        // Predicated region
        $region45: #{tpu_custom_call.1} parent=43 // pred_check
          %p361 = pneg %p108
        $region46: #{tpu_custom_call.1} parent=43 // pred_check_branch
          %363 = sbr.rel (%p361) target = $region48
        $region47: #{tpu_custom_call.1} parent=43 // pred_region
          %s364 = sand.u32 %s93, 1
          %s365 = scalar_lea.sflag [#allocation4], %s364
          %s366 = sand.u32 %s93, 1
          %s367 = smul.addr %s366, 16
          %s368 = scalar_lea.vmem [#allocation5], %s367
          %369 = dma.done %s365, 256
        $region48: #{tpu_custom_call.1} parent=43 // pred_fallthru
          _
        // Predicated region
        $region49: #{tpu_custom_call.1} parent=43 // pred_check
          %p370 = pneg %p136
        $region50: #{tpu_custom_call.1} parent=43 // pred_check_branch
          %372 = sbr.rel (%p370) target = $region52
        $region51: #{tpu_custom_call.1} parent=43 // pred_region
          %p373 = scmp.lt.s32.totalorder %s27, 1
          %s374 = scalar_select %p373, %s27, 1
          %p375 = scmp.lt.s32.totalorder %s28, 0
          %s376 = scalar_select %p375, %s28, 0
          %s377 = sadd.s32 %s376, %s374
          %s378 = smul.addr %s377, 8
          %s379 = scalar_lea.vmem %s3, %s378
        $region52: #{tpu_custom_call.1} parent=43 // pred_fallthru
          _
      $region44: #{tpu_custom_call.1} parent=5 // pred_fallthru
        _
    $region6: #{tpu_custom_call.1} parent=1 // loop_footer
      %s20 = sadd.s32 1, %s16
    $region7: #{tpu_custom_call.1} parent=1 // loop_footer_branch
      %15 = sbr.rel target = $region3
    $region8: #{tpu_custom_call.1} parent=1 // loop_exit
      _
    %380 = vsyncpa [#allocation3], 1
    %s381 = scalar_lea.sflag [#allocation3], 1
    %382 = vsyncpa %s381, 1
    %383 = vsyncpa [#allocation4], 1
    %s384 = scalar_lea.sflag [#allocation4], 1
    %385 = vsyncpa %s384, 1

</llo_original>
